<compile_context>
chip_gen: v5e
topology: v5e:2x2
jax: 0.10.0
libtpu: 0.0.40
codegen_flags: <defaults>
</compile_context>

<pallas_src>
import jax
import jax.numpy as jnp
from jax.experimental import pallas as pl
from jax.experimental.pallas import tpu as pltpu


def _att_scale_kernel(scale_ref, x_ref, o_ref):
    # scale_ref: (row_t, 1), x_ref/o_ref: (row_t, hw_t) -- native dtype multiply.
    o_ref[...] = x_ref[...] * scale_ref[...]


def _pick_tile(extent, align, max_tile):
    """Largest tile <= max_tile that is a multiple of `align` and divides
    `extent` evenly; falls back to the full extent when unaligned (full-extent
    blocks are always legal)."""
    if extent % align != 0:
        return extent
    tile = min(extent, max_tile)
    tile = max(align, (tile // align) * align)
    while tile > align and extent % tile != 0:
        tile -= align
    return tile


def _choose_blocks(rows, hw, itemsize, max_block_bytes=2 * 1024 * 1024):
    """Pick (row_t, hw_t) that keep one block <= ~2 MiB so double-buffered
    in+out fits the default scoped VMEM on v5e/v6e/v7x."""
    hw_t = _pick_tile(hw, 128, 2048)
    max_rows = max(8, max_block_bytes // max(1, hw_t * itemsize))
    if rows % 8 == 0:
        row_cap = max(8, (max_rows // 8) * 8)
        row_t = _pick_tile(rows, 8, min(256, row_cap))
    else:
        row_t = rows  # small / unaligned: full extent is always legal
    return row_t, hw_t


def att_block_forward(x, demog_label, att_channel, *, init_strategy="xavier",
                      att_mock=False, donate_x=False):
    """x: (B, C, H, W); demog_label: (B,) int; att_channel: (ndemog,1,C,1,1)."""
    if att_mock:
        return x

    B, C, H, W = x.shape
    ndemog = att_channel.shape[0]
    HW = H * W
    rows = B * C

    # Hoisted gather + sigmoid (tiny (ndemog, C) -> (B, C)), done in f32.
    att = jax.nn.sigmoid(att_channel.reshape(ndemog, C).astype(jnp.float32))
    if init_strategy == "ones":
        att = att * 2.0
    scale = jnp.take(att, demog_label.astype(jnp.int32), axis=0)   # (B, C)
    scale = scale.astype(x.dtype).reshape(rows, 1)                 # (B*C, 1)

    x2 = x.reshape(rows, HW)

    row_t, hw_t = _choose_blocks(rows, HW, jnp.dtype(x.dtype).itemsize)
    grid = (rows // row_t, HW // hw_t)

    extra = {}
    if donate_x:
        # Output reuses x's buffer (halves HBM footprint; traffic unchanged).
        extra["input_output_aliases"] = {1: 0}

    out = pl.pallas_call(
        _att_scale_kernel,
        out_shape=jax.ShapeDtypeStruct((rows, HW), x.dtype),
        grid=grid,
        in_specs=[
            # Scale stays resident across the HW grid axis (same block index).
            pl.BlockSpec((row_t, 1), lambda r, c: (r, 0)),
            pl.BlockSpec((row_t, hw_t), lambda r, c: (r, c)),
        ],
        out_specs=pl.BlockSpec((row_t, hw_t), lambda r, c: (r, c)),
        compiler_params=pltpu.CompilerParams(
            dimension_semantics=("parallel", "parallel")),
        **extra,
    )(scale, x2)

    return out.reshape(B, C, H, W)


def init_att_channel(key, nchannel, ndemog=4, init_strategy="xavier"):
    """Synthetic init matching the PyTorch parameter shape (ndemog,1,C,1,1)."""
    if init_strategy == "xavier":
        bound = jnp.sqrt(3.0 / nchannel)  # xavier_uniform on (1,1,C,1,1)
        base = jax.random.uniform(key, (1, 1, nchannel, 1, 1),
                                  minval=-bound, maxval=bound,
                                  dtype=jnp.float32)
    else:  # 'ones' strategy fills with 0 (matches the PyTorch module)
        base = jnp.zeros((1, 1, nchannel, 1, 1), jnp.float32)
    return jnp.tile(base, (ndemog, 1, 1, 1, 1))


if __name__ == "__main__":
    key = jax.random.PRNGKey(0)
    k_x, k_p, k_d = jax.random.split(key, 3)

    B, C, H, W = 2, 4, 16, 16
    ndemog = 4

    x = jax.random.normal(k_x, (B, C, H, W), dtype=jnp.float32)
    demog_label = jax.random.randint(k_d, (B,), 0, ndemog, dtype=jnp.int32)
    att_channel = init_att_channel(k_p, C, ndemog, init_strategy="xavier")

    # xavier path
    y = att_block_forward(x, demog_label, att_channel,
                          init_strategy="xavier", att_mock=False)
    y = jax.block_until_ready(y)

    att_ref = jax.nn.sigmoid(att_channel)            # (ndemog,1,C,1,1)
    y_ref = x * att_ref[demog_label][:, 0]           # (B,C,1,1) broadcast
    assert jnp.allclose(y, y_ref, atol=1e-6, rtol=1e-6), "xavier path mismatch"

    # 'ones' path: param filled with 0 -> sigmoid(0)*2 == 1 -> identity
    att_ones = init_att_channel(k_p, C, ndemog, init_strategy="ones")
    y1 = jax.block_until_ready(
        att_block_forward(x, demog_label, att_ones, init_strategy="ones"))
    assert jnp.allclose(y1, x, atol=1e-6, rtol=1e-6), "ones path mismatch"

    print("KERNEL_OK")
</pallas_src>

<mosaic_0001>
module attributes {stable_mosaic.version = 11 : i64} {
  func.func @_att_scale_kernel(%arg0: i32, %arg1: i32, %arg2: memref<8x1xf32, #tpu.memory_space<vmem>>, %arg3: memref<8x256xf32, #tpu.memory_space<vmem>>, %arg4: memref<8x256xf32, #tpu.memory_space<vmem>>) attributes {dimension_semantics = [#tpu.dimension_semantics<parallel>, #tpu.dimension_semantics<parallel>], iteration_bounds = array<i64: 1, 1>, scalar_prefetch = 0 : i64, scratch_operands = 0 : i64, tpu.core_type = #tpu.core_type<tc>, window_params = [{transform_indices = @transform_0, window_bounds = array<i64: 8, 1>}, {transform_indices = @transform_1, window_bounds = array<i64: 8, 256>}, {transform_indices = @transform_2, window_bounds = array<i64: 8, 256>}]} {
    %c0 = arith.constant 0 : index
    %c0_0 = arith.constant 0 : index
    %0 = vector.load %arg3[%c0, %c0_0] : memref<8x256xf32, #tpu.memory_space<vmem>>, vector<8x256xf32>
    %c0_1 = arith.constant 0 : index
    %c0_2 = arith.constant 0 : index
    %1 = vector.load %arg2[%c0_1, %c0_2] : memref<8x1xf32, #tpu.memory_space<vmem>>, vector<8x1xf32>
    %2 = vector.broadcast %1 : vector<8x1xf32> to vector<8x256xf32>
    %3 = arith.mulf %0, %2 : vector<8x256xf32>
    %c0_3 = arith.constant 0 : index
    %c0_4 = arith.constant 0 : index
    %4 = vector.load %arg4[%c0_3, %c0_4] : memref<8x256xf32, #tpu.memory_space<vmem>>, vector<8x256xf32>
    tpu.vector_store %arg4[%c0_3, %c0_4], %3 {strides = array<i32>} : memref<8x256xf32, #tpu.memory_space<vmem>>, vector<8x256xf32>,
    return
  }
  func.func @transform_0(%arg0: i32, %arg1: i32) -> (i32, i32) {
    %c0_i32 = arith.constant 0 : i32
    %c0_i32_0 = arith.constant 0 : i32
    return %arg0, %c0_i32 : i32, i32
  }
  func.func @transform_1(%arg0: i32, %arg1: i32) -> (i32, i32) {
    %c0_i32 = arith.constant 0 : i32
    return %arg0, %arg1 : i32, i32
  }
  func.func @transform_2(%arg0: i32, %arg1: i32) -> (i32, i32) {
    %c0_i32 = arith.constant 0 : i32
    return %arg0, %arg1 : i32, i32
  }
}

</mosaic_0001>

<llo_original>
// kernel: tpu_custom_call.1
$region0: #{tpu_custom_call.1}
  #allocation0 [shape = 'u32[]', space=smem, size = 0x4, offset = 0x4, fixed_abs, tag = 'smem constant byte address 0x4 - core index']
  #allocation1 [shape = 'u32[72,128]{1,0:T(1,128)}', space=vmem, size = 0x9000, scoped, tag = 'internal scratch']
  %s0 = inlined_call_operand.vmem [shape: f32[8,1], index: 0, kind: input, shape index: {}]
  %s1 = inlined_call_operand.hbm [shape: f32[8,256], index: 1, kind: input, shape index: {}]
  %s2 = inlined_call_operand.hbm [shape: f32[8,256], index: 2, kind: output, shape index: {}]
  %s3 = sld [smem:[#allocation0]]
  $region22: #{tpu_custom_call.1} parent=0
    _
  %s5 = ssub.s32 1, %s3
  %s6 = scalar_select 0, %s5, %s3
  $region1: #{tpu_custom_call.1} parent=0
    #allocation2 [shape = 'u8[8192]{0}', space=vmem, size = 0x2000, scoped, tag = 'input window, operand 1, single buffered']
    #allocation3 [shape = 's32[1]{0}', space=sflag, size = 0x4, scoped, tag = 'scoped memory for tpu_custom_call.1']
    #allocation4 [shape = 's32[1]{0}', space=sflag, size = 0x4, scoped, tag = 'scoped memory for tpu_custom_call.1']
    #allocation5 [shape = 'u8[8192]{0}', space=vmem, size = 0x2000, scoped, tag = 'output window, operand 0, single buffered']
    %7 = vsyncpa [#allocation3], 0
    %8 = vsyncpa [#allocation4], 0
    // Predicated region
    $region2: #{tpu_custom_call.1} parent=1 // pred_check
      _
    $region3: #{tpu_custom_call.1} parent=1 // pred_check_branch
      %10 = sbr.rel (0) target = $region5
    $region4: #{tpu_custom_call.1} parent=1 // pred_region
      _
    $region5: #{tpu_custom_call.1} parent=1 // pred_fallthru
      _
    // Predicated region
    $region6: #{tpu_custom_call.1} parent=1 // pred_check
      _
    $region7: #{tpu_custom_call.1} parent=1 // pred_check_branch
      %12 = sbr.rel (0) target = $region9
    $region8: #{tpu_custom_call.1} parent=1 // pred_region
      %14 = vsyncadd [#allocation3], 0
      %s16 = sshll.u32 %s1, 4
      %s17 = int_to_ptr.hbm [resolvable:$true] %s16
      %s18 = sshll.u32 [#allocation2], 4
      %s19 = int_to_ptr.vmem [resolvable:$true] %s18
      %21 = dma.hbm_to_vmem [thread:$0]  %s17, 256, %s19, [#allocation3]
    $region9: #{tpu_custom_call.1} parent=1 // pred_fallthru
      _
    // Predicated region
    $region10: #{tpu_custom_call.1} parent=1 // pred_check
      _
    $region11: #{tpu_custom_call.1} parent=1 // pred_check_branch
      %23 = sbr.rel (0) target = $region13
    $region12: #{tpu_custom_call.1} parent=1 // pred_region
      %25 = dma.done [#allocation3], 256
    $region13: #{tpu_custom_call.1} parent=1 // pred_fallthru
      _
    %v26 = vld [vmem:[#allocation2] sm:$0xff]
    %v27 = vld [vmem:[#allocation2 + $0x8] sm:$0xff]
    %v28 = vld [vmem:[%s0] sm:$0xff]
    %30 = vset.pattern.permute.xlu0 0
    %31 = vperm.xlu0 %30, %v28
    %v32 = vpop.permute.xlu0 %31
    %v34 = vmul.f32 %v26, %v32
    %v35 = vmul.f32 %v27, %v32
    %36 = vst [vmem:[#allocation5] sm:$0xff] %v34
    %37 = vst [vmem:[#allocation5 + $0x8] sm:$0xff] %v35
    // Predicated region
    $region14: #{tpu_custom_call.1} parent=1 // pred_check
      _
    $region15: #{tpu_custom_call.1} parent=1 // pred_check_branch
      %39 = sbr.rel (0) target = $region17
    $region16: #{tpu_custom_call.1} parent=1 // pred_region
      %41 = vsyncadd [#allocation4], 0
      %s43 = sshll.u32 [#allocation5], 4
      %s44 = int_to_ptr.vmem [resolvable:$true] %s43
      %s45 = sshll.u32 %s2, 4
      %s46 = int_to_ptr.hbm [resolvable:$true] %s45
      %48 = dma.vmem_to_hbm [thread:$0]  %s44, 256, %s46, [#allocation4]
    $region17: #{tpu_custom_call.1} parent=1 // pred_fallthru
      _
    // Predicated region
    $region18: #{tpu_custom_call.1} parent=1 // pred_check
      _
    $region19: #{tpu_custom_call.1} parent=1 // pred_check_branch
      %50 = sbr.rel (0) target = $region21
    $region20: #{tpu_custom_call.1} parent=1 // pred_region
      %52 = dma.done [#allocation4], 256
    $region21: #{tpu_custom_call.1} parent=1 // pred_fallthru
      _
    %53 = vsyncpa [#allocation3], 1
    %54 = vsyncpa [#allocation4], 1

</llo_original>
